<compile_context>
chip_gen: v6e
topology: v6e:2x2x1
jax: 0.10.0
libtpu: 0.0.40
codegen_flags: <defaults>
</compile_context>

<pallas_src>
import functools

import jax
import jax.numpy as jnp
import numpy as np
from jax import lax
from jax.experimental import pallas as pl
from jax.experimental.pallas import tpu as pltpu


def _moe_head_kernel(f_ref, wg_ref, bg_ref, wc_ref, bcs_ref, out_ref, *,
                     topk, full_topk, matmul_dtype):
    # f_ref  : (TB, N, D)    features for TB batch elements
    # wg_ref : (D, E)        gate weight (transposed)
    # bg_ref : (1, E)        gate bias
    # wc_ref : (E*D, Lp)     flattened per-expert classifier weights (lane-padded)
    # bcs_ref: (1, Lp)       sum over experts of classifier biases (lane-padded)
    # out_ref: (TB, 1, Lp)   lane-dense logits block
    TB, N, D = f_ref.shape
    E = wg_ref.shape[1]
    Lp = wc_ref.shape[1]

    xm = f_ref[...].astype(matmul_dtype)                              # (TB, N, D)

    # ---- gate: one fused (TB*N, D) @ (D, E) MXU matmul, f32 accumulation ----
    gate = jnp.dot(xm.reshape(TB * N, D), wg_ref[...],
                   preferred_element_type=jnp.float32)
    gate = gate.reshape(TB, N, E) + bg_ref[...].astype(jnp.float32)   # (TB, N, E)

    # ---- softmax over tokens, vectorized over (batch, expert) ----
    m = jnp.max(gate, axis=1, keepdims=True)
    p = jnp.exp(gate - m)
    p = p * pl.reciprocal(jnp.sum(p, axis=1, keepdims=True), approx=True)  # (TB, N, E)

    if full_topk:
        # topk == N: every token is selected; the top-k softmax over the gate
        # probabilities is just a softmax over tokens (order independent).
        mm = jnp.max(p, axis=1, keepdims=True)
        w = jnp.exp(p - mm)
        alpha = w * pl.reciprocal(jnp.sum(w, axis=1, keepdims=True), approx=True)
    else:
        # Iterative top-k by masking, vectorized over all experts & batch rows.
        iota_n = lax.broadcasted_iota(jnp.int32, (TB, N, E), 1)
        work = p
        vals, onehots = [], []
        for _ in range(topk):                       # topk is static & small
            mv = jnp.max(work, axis=1, keepdims=True)               # (TB, 1, E)
            is_max = work == mv
            # first (lowest-index) maximum, matching top_k's tie convention
            idx = jnp.min(jnp.where(is_max, iota_n, N), axis=1, keepdims=True)
            oh = (iota_n == idx).astype(jnp.float32)                 # (TB, N, E)
            vals.append(mv)
            onehots.append(oh)
            work = jnp.where(oh > 0, -jnp.inf, work)
        # softmax over the top-k gate probabilities
        vmax = vals[0]
        for v in vals[1:]:
            vmax = jnp.maximum(vmax, v)
        exps = [jnp.exp(v - vmax) for v in vals]
        denom = exps[0]
        for ev in exps[1:]:
            denom = denom + ev
        inv = pl.reciprocal(denom, approx=True)                      # (TB, 1, E)
        alpha = jnp.zeros((TB, N, E), jnp.float32)
        for ev, oh in zip(exps, onehots):
            alpha = alpha + (ev * inv) * oh                          # (TB, N, E)

    # ---- weighted token combine on the MXU (was a VPU/XLU multiply-reduce) ----
    # combined[b, e, :] = sum_n alpha[b, n, e] * x[b, n, :]
    combined = jnp.einsum("bne,bnd->bed", alpha.astype(matmul_dtype), xm,
                          preferred_element_type=jnp.float32)        # (TB, E, D)

    # ---- fused expert classifier: sum_e c_e @ W_e == c_flat @ W_flat ----
    logits = jnp.dot(combined.reshape(TB, E * D).astype(matmul_dtype), wc_ref[...],
                     preferred_element_type=jnp.float32)             # (TB, Lp)
    logits = (logits + bcs_ref[...].astype(jnp.float32)) * (1.0 / E)  # mean over experts
    out_ref[...] = logits.reshape(TB, 1, Lp)


def _pick_batch_tile(B, max_tile):
    """Largest divisor of B that is <= max_tile while keeping >= 2 grid steps
    (so both TensorCores on v7x get work)."""
    best = 1
    for t in range(1, min(B, max_tile) + 1):
        if B % t == 0 and B // t >= 2:
            best = t
    return best


def moe_linear_head(features, gate_w, gate_b, cls_w, cls_b, topk, *,
                    batch_tile=8, matmul_dtype=None):
    """features: (B, N, D). gate_w: (D, E), gate_b: (1, E) or (E,),
    cls_w: (E, D, L), cls_b: (E, L).  Returns logits (B, L) f32."""
    B, N, D = features.shape
    E = gate_w.shape[1]
    L = cls_w.shape[-1]

    if matmul_dtype is None:
        matmul_dtype = features.dtype          # use jnp.bfloat16 on v6e / v7x

    topk = N if topk == -1 else max(1, min(topk, N))
    full_topk = topk == N

    # Lane-dense (128-multiple) label dim for the output store path.
    Lp = ((L + 127) // 128) * 128

    # Flatten the stacked expert weights to (E*D, Lp); pad extra label lanes with 0.
    wc_flat = jnp.zeros((E * D, Lp), cls_w.dtype).at[:, :L].set(cls_w.reshape(E * D, L))
    wc_flat = wc_flat.astype(matmul_dtype)
    gate_wm = gate_w.astype(matmul_dtype)
    # Top-k softmax weights sum to 1 -> each expert contributes its bias once.
    bc_sum = jnp.zeros((1, Lp), jnp.float32).at[:, :L].set(
        jnp.sum(cls_b.astype(jnp.float32), axis=0, keepdims=True))
    gate_b2 = gate_b.reshape(1, E).astype(jnp.float32)

    tb = _pick_batch_tile(B, batch_tile)
    grid = (B // tb,)

    kernel = functools.partial(_moe_head_kernel, topk=topk, full_topk=full_topk,
                               matmul_dtype=matmul_dtype)
    out = pl.pallas_call(
        kernel,
        out_shape=jax.ShapeDtypeStruct((B, 1, Lp), jnp.float32),
        grid=grid,
        in_specs=[
            pl.BlockSpec((tb, N, D), lambda b: (b, 0, 0)),
            pl.BlockSpec((D, E), lambda b: (0, 0)),
            pl.BlockSpec((1, E), lambda b: (0, 0)),
            pl.BlockSpec((E * D, Lp), lambda b: (0, 0)),
            pl.BlockSpec((1, Lp), lambda b: (0, 0)),
        ],
        out_specs=pl.BlockSpec((tb, 1, Lp), lambda b: (b, 0, 0)),
        compiler_params=pltpu.CompilerParams(dimension_semantics=("parallel",)),
    )(features, gate_wm, gate_b2, wc_flat, bc_sum)
    return out[:, 0, :L]


def moe_linear_head_ref(features, gate_w, gate_b, cls_w, cls_b, topk):
    """Pure-JAX reference mirroring the PyTorch forward exactly."""
    B, N, D = features.shape
    E = gate_w.shape[1]
    if topk == -1:
        topk = N
    gate_score = features @ gate_w + gate_b.reshape(1, 1, E)   # (B, N, E)
    gate_score = jnp.transpose(gate_score, (0, 2, 1))          # (B, E, N)
    gate_prob = jax.nn.softmax(gate_score, axis=-1)
    expert_logits = []
    for i in range(E):
        vals, idx = lax.top_k(gate_prob[:, i, :], topk)        # (B, k)
        topk_feat = jnp.take_along_axis(features, idx[:, :, None], axis=1)  # (B, k, D)
        w = jax.nn.softmax(vals, axis=-1)[:, :, None]          # (B, k, 1)
        logits = topk_feat @ cls_w[i] + cls_b[i]               # (B, k, L)
        expert_logits.append(jnp.sum(logits * w, axis=1))
    return jnp.mean(jnp.stack(expert_logits, axis=-1), axis=-1)


if __name__ == "__main__":
    # Small shapes consistent with the module's forward.
    B, N, D = 2, 8, 32          # batch, tokens, embed_dim
    E, L, TOPK = 4, 10, 3       # num_experts, num_labels, topk

    key = jax.random.PRNGKey(0)
    k_feat, k_gw, k_gb, k_cw, k_cb = jax.random.split(key, 5)

    features = jax.random.normal(k_feat, (B, N, D), dtype=jnp.float32)
    gate_w = 0.1 * jax.random.normal(k_gw, (D, E), dtype=jnp.float32)     # (in, out)
    gate_b = 0.1 * jax.random.normal(k_gb, (1, E), dtype=jnp.float32)
    cls_w = 0.1 * jax.random.normal(k_cw, (E, D, L), dtype=jnp.float32)   # per-expert (in, out)
    cls_b = 0.1 * jax.random.normal(k_cb, (E, L), dtype=jnp.float32)

    # top-k path
    logits = moe_linear_head(features, gate_w, gate_b, cls_w, cls_b, TOPK)
    logits = jax.block_until_ready(logits)
    ref = moe_linear_head_ref(features, gate_w, gate_b, cls_w, cls_b, TOPK)
    np.testing.assert_allclose(np.asarray(logits), np.asarray(ref), rtol=1e-2, atol=1e-3)

    # topk = -1 (all tokens) specialized path
    logits_full = moe_linear_head(features, gate_w, gate_b, cls_w, cls_b, -1)
    logits_full = jax.block_until_ready(logits_full)
    ref_full = moe_linear_head_ref(features, gate_w, gate_b, cls_w, cls_b, -1)
    np.testing.assert_allclose(np.asarray(logits_full), np.asarray(ref_full),
                               rtol=1e-2, atol=1e-3)

    print("KERNEL_OK")
</pallas_src>

<mosaic_0001>
module attributes {stable_mosaic.version = 11 : i64} {
  func.func @_moe_head_kernel(%arg0: i32, %arg1: memref<1x8x32xf32, #tpu.memory_space<vmem>>, %arg2: memref<32x4xf32, #tpu.memory_space<vmem>>, %arg3: memref<1x4xf32, #tpu.memory_space<vmem>>, %arg4: memref<128x128xf32, #tpu.memory_space<vmem>>, %arg5: memref<1x128xf32, #tpu.memory_space<vmem>>, %arg6: memref<1x1x128xf32, #tpu.memory_space<vmem>>) attributes {dimension_semantics = [#tpu.dimension_semantics<parallel>], iteration_bounds = array<i64: 2>, scalar_prefetch = 0 : i64, scratch_operands = 0 : i64, tpu.core_type = #tpu.core_type<tc>, window_params = [{transform_indices = @transform_0, window_bounds = array<i64: 1, 8, 32>}, {pipeline_mode = #tpu.pipeline_mode<synchronous>, transform_indices = @transform_1, window_bounds = array<i64: 32, 4>}, {pipeline_mode = #tpu.pipeline_mode<synchronous>, transform_indices = @transform_2, window_bounds = array<i64: 1, 4>}, {pipeline_mode = #tpu.pipeline_mode<synchronous>, transform_indices = @transform_3, window_bounds = array<i64: 128, 128>}, {pipeline_mode = #tpu.pipeline_mode<synchronous>, transform_indices = @transform_4, window_bounds = array<i64: 1, 128>}, {transform_indices = @transform_5, window_bounds = array<i64: 1, 1, 128>}]} {
    %c0 = arith.constant 0 : index
    %c0_0 = arith.constant 0 : index
    %c0_1 = arith.constant 0 : index
    %0 = vector.load %arg1[%c0, %c0_0, %c0_1] : memref<1x8x32xf32, #tpu.memory_space<vmem>>, vector<1x8x32xf32>
    %1 = vector.shape_cast %0 : vector<1x8x32xf32> to vector<8x32xf32>
    %c0_2 = arith.constant 0 : index
    %c0_3 = arith.constant 0 : index
    %2 = vector.load %arg2[%c0_2, %c0_3] : memref<32x4xf32, #tpu.memory_space<vmem>>, vector<32x4xf32>
    %cst = arith.constant dense<0.000000e+00> : vector<8x4xf32>
    %3 = tpu.matmul %1, %2, %cst {dimension_numbers = #tpu.dot_dimension_numbers<[1], [0], [0], [1], [0, 0, 1, 1], [], []>} : vector<8x32xf32>, vector<32x4xf32>, vector<8x4xf32> -> vector<8x4xf32>
    %4 = vector.shape_cast %3 : vector<8x4xf32> to vector<1x8x4xf32>
    %c0_4 = arith.constant 0 : index
    %c0_5 = arith.constant 0 : index
    %5 = vector.load %arg3[%c0_4, %c0_5] : memref<1x4xf32, #tpu.memory_space<vmem>>, vector<1x4xf32>
    %6 = vector.shape_cast %5 : vector<1x4xf32> to vector<1x1x4xf32>
    %7 = vector.broadcast %6 : vector<1x1x4xf32> to vector<1x8x4xf32>
    %8 = arith.addf %4, %7 : vector<1x8x4xf32>
    %cst_6 = arith.constant dense<0xFF800000> : vector<1x4xf32>
    %9 = vector.multi_reduction <maximumf>, %8, %cst_6 [1] : vector<1x8x4xf32> to vector<1x4xf32>
    %10 = vector.shape_cast %9 : vector<1x4xf32> to vector<1x1x4xf32>
    %11 = vector.broadcast %10 : vector<1x1x4xf32> to vector<1x8x4xf32>
    %12 = arith.subf %8, %11 : vector<1x8x4xf32>
    %13 = math.exp %12 : vector<1x8x4xf32>
    %cst_7 = arith.constant dense<0.000000e+00> : vector<1x4xf32>
    %14 = vector.multi_reduction <add>, %13, %cst_7 [1] : vector<1x8x4xf32> to vector<1x4xf32>
    %15 = vector.shape_cast %14 : vector<1x4xf32> to vector<1x1x4xf32>
    %16 = tpu.reciprocal %15 {approx = true} : vector<1x1x4xf32> -> vector<1x1x4xf32>
    %17 = vector.broadcast %16 : vector<1x1x4xf32> to vector<1x8x4xf32>
    %18 = arith.mulf %13, %17 : vector<1x8x4xf32>
    %19 = tpu.iota {dimensions = array<i32: 1>} : vector<1x8x4xi32>
    %cst_8 = arith.constant dense<0xFF800000> : vector<1x4xf32>
    %20 = vector.multi_reduction <maximumf>, %18, %cst_8 [1] : vector<1x8x4xf32> to vector<1x4xf32>
    %21 = vector.shape_cast %20 : vector<1x4xf32> to vector<1x1x4xf32>
    %22 = vector.broadcast %21 : vector<1x1x4xf32> to vector<1x8x4xf32>
    %23 = arith.cmpf oeq, %18, %22 : vector<1x8x4xf32>
    %c8_i32 = arith.constant 8 : i32
    %24 = vector.broadcast %c8_i32 : i32 to vector<1x8x4xi32>
    %25 = arith.select %23, %19, %24 : vector<1x8x4xi1>, vector<1x8x4xi32>
    %cst_9 = arith.constant dense<2147483647> : vector<1x4xi32>
    %26 = vector.multi_reduction <minsi>, %25, %cst_9 [1] : vector<1x8x4xi32> to vector<1x4xi32>
    %27 = vector.shape_cast %26 : vector<1x4xi32> to vector<1x1x4xi32>
    %28 = vector.broadcast %27 : vector<1x1x4xi32> to vector<1x8x4xi32>
    %29 = arith.cmpi eq, %19, %28 : vector<1x8x4xi32>
    %30 = arith.extui %29 : vector<1x8x4xi1> to vector<1x8x4xi32>
    %31 = arith.sitofp %30 : vector<1x8x4xi32> to vector<1x8x4xf32>
    %cst_10 = arith.constant 0.000000e+00 : f32
    %32 = vector.broadcast %cst_10 : f32 to vector<1x8x4xf32>
    %33 = arith.cmpf ogt, %31, %32 : vector<1x8x4xf32>
    %cst_11 = arith.constant 0xFF800000 : f32
    %34 = vector.broadcast %cst_11 : f32 to vector<1x8x4xf32>
    %35 = arith.select %33, %34, %18 : vector<1x8x4xi1>, vector<1x8x4xf32>
    %cst_12 = arith.constant dense<0xFF800000> : vector<1x4xf32>
    %36 = vector.multi_reduction <maximumf>, %35, %cst_12 [1] : vector<1x8x4xf32> to vector<1x4xf32>
    %37 = vector.shape_cast %36 : vector<1x4xf32> to vector<1x1x4xf32>
    %38 = vector.broadcast %37 : vector<1x1x4xf32> to vector<1x8x4xf32>
    %39 = arith.cmpf oeq, %35, %38 : vector<1x8x4xf32>
    %c8_i32_13 = arith.constant 8 : i32
    %40 = vector.broadcast %c8_i32_13 : i32 to vector<1x8x4xi32>
    %41 = arith.select %39, %19, %40 : vector<1x8x4xi1>, vector<1x8x4xi32>
    %cst_14 = arith.constant dense<2147483647> : vector<1x4xi32>
    %42 = vector.multi_reduction <minsi>, %41, %cst_14 [1] : vector<1x8x4xi32> to vector<1x4xi32>
    %43 = vector.shape_cast %42 : vector<1x4xi32> to vector<1x1x4xi32>
    %44 = vector.broadcast %43 : vector<1x1x4xi32> to vector<1x8x4xi32>
    %45 = arith.cmpi eq, %19, %44 : vector<1x8x4xi32>
    %46 = arith.extui %45 : vector<1x8x4xi1> to vector<1x8x4xi32>
    %47 = arith.sitofp %46 : vector<1x8x4xi32> to vector<1x8x4xf32>
    %cst_15 = arith.constant 0.000000e+00 : f32
    %48 = vector.broadcast %cst_15 : f32 to vector<1x8x4xf32>
    %49 = arith.cmpf ogt, %47, %48 : vector<1x8x4xf32>
    %cst_16 = arith.constant 0xFF800000 : f32
    %50 = vector.broadcast %cst_16 : f32 to vector<1x8x4xf32>
    %51 = arith.select %49, %50, %35 : vector<1x8x4xi1>, vector<1x8x4xf32>
    %cst_17 = arith.constant dense<0xFF800000> : vector<1x4xf32>
    %52 = vector.multi_reduction <maximumf>, %51, %cst_17 [1] : vector<1x8x4xf32> to vector<1x4xf32>
    %53 = vector.shape_cast %52 : vector<1x4xf32> to vector<1x1x4xf32>
    %54 = vector.broadcast %53 : vector<1x1x4xf32> to vector<1x8x4xf32>
    %55 = arith.cmpf oeq, %51, %54 : vector<1x8x4xf32>
    %c8_i32_18 = arith.constant 8 : i32
    %56 = vector.broadcast %c8_i32_18 : i32 to vector<1x8x4xi32>
    %57 = arith.select %55, %19, %56 : vector<1x8x4xi1>, vector<1x8x4xi32>
    %cst_19 = arith.constant dense<2147483647> : vector<1x4xi32>
    %58 = vector.multi_reduction <minsi>, %57, %cst_19 [1] : vector<1x8x4xi32> to vector<1x4xi32>
    %59 = vector.shape_cast %58 : vector<1x4xi32> to vector<1x1x4xi32>
    %60 = vector.broadcast %59 : vector<1x1x4xi32> to vector<1x8x4xi32>
    %61 = arith.cmpi eq, %19, %60 : vector<1x8x4xi32>
    %62 = arith.extui %61 : vector<1x8x4xi1> to vector<1x8x4xi32>
    %63 = arith.sitofp %62 : vector<1x8x4xi32> to vector<1x8x4xf32>
    %64 = arith.maximumf %21, %37 : vector<1x1x4xf32>
    %65 = arith.maximumf %64, %53 : vector<1x1x4xf32>
    %66 = arith.subf %21, %65 : vector<1x1x4xf32>
    %67 = math.exp %66 : vector<1x1x4xf32>
    %68 = arith.subf %37, %65 : vector<1x1x4xf32>
    %69 = math.exp %68 : vector<1x1x4xf32>
    %70 = arith.subf %53, %65 : vector<1x1x4xf32>
    %71 = math.exp %70 : vector<1x1x4xf32>
    %72 = arith.addf %67, %69 : vector<1x1x4xf32>
    %73 = arith.addf %72, %71 : vector<1x1x4xf32>
    %74 = tpu.reciprocal %73 {approx = true} : vector<1x1x4xf32> -> vector<1x1x4xf32>
    %cst_20 = arith.constant 0.000000e+00 : f32
    %75 = vector.broadcast %cst_20 : f32 to vector<1x8x4xf32>
    %76 = arith.mulf %67, %74 : vector<1x1x4xf32>
    %77 = vector.broadcast %76 : vector<1x1x4xf32> to vector<1x8x4xf32>
    %78 = arith.mulf %77, %31 : vector<1x8x4xf32>
    %79 = arith.addf %75, %78 : vector<1x8x4xf32>
    %80 = arith.mulf %69, %74 : vector<1x1x4xf32>
    %81 = vector.broadcast %80 : vector<1x1x4xf32> to vector<1x8x4xf32>
    %82 = arith.mulf %81, %47 : vector<1x8x4xf32>
    %83 = arith.addf %79, %82 : vector<1x8x4xf32>
    %84 = arith.mulf %71, %74 : vector<1x1x4xf32>
    %85 = vector.broadcast %84 : vector<1x1x4xf32> to vector<1x8x4xf32>
    %86 = arith.mulf %85, %63 : vector<1x8x4xf32>
    %87 = arith.addf %83, %86 : vector<1x8x4xf32>
    "tpu.trace_start"() <{level = 10 : i32, message = "bne,bnd->bed"}> : () -> ()
    %cst_21 = arith.constant dense<0.000000e+00> : vector<1x4x32xf32>
    %88 = tpu.matmul %87, %0, %cst_21 {dimension_numbers = #tpu.dot_dimension_numbers<[1], [1], [2], [2], [0, 0, 0, 2, 1, 2], [0], [0]>} : vector<1x8x4xf32>, vector<1x8x32xf32>, vector<1x4x32xf32> -> vector<1x4x32xf32>
    "tpu.trace_stop"() : () -> ()
    %89 = vector.shape_cast %88 : vector<1x4x32xf32> to vector<1x128xf32>
    %c0_22 = arith.constant 0 : index
    %c0_23 = arith.constant 0 : index
    %90 = vector.load %arg4[%c0_22, %c0_23] : memref<128x128xf32, #tpu.memory_space<vmem>>, vector<128x128xf32>
    %cst_24 = arith.constant dense<0.000000e+00> : vector<1x128xf32>
    %91 = tpu.matmul %89, %90, %cst_24 {dimension_numbers = #tpu.dot_dimension_numbers<[1], [0], [0], [1], [0, 0, 1, 1], [], []>} : vector<1x128xf32>, vector<128x128xf32>, vector<1x128xf32> -> vector<1x128xf32>
    %c0_25 = arith.constant 0 : index
    %c0_26 = arith.constant 0 : index
    %92 = vector.load %arg5[%c0_25, %c0_26] : memref<1x128xf32, #tpu.memory_space<vmem>>, vector<1x128xf32>
    %93 = arith.addf %91, %92 : vector<1x128xf32>
    %cst_27 = arith.constant 2.500000e-01 : f32
    %94 = vector.broadcast %cst_27 : f32 to vector<1x128xf32>
    %95 = arith.mulf %93, %94 : vector<1x128xf32>
    %96 = vector.shape_cast %95 : vector<1x128xf32> to vector<1x1x128xf32>
    %c0_28 = arith.constant 0 : index
    %c0_29 = arith.constant 0 : index
    %c0_30 = arith.constant 0 : index
    %97 = vector.load %arg6[%c0_28, %c0_29, %c0_30] : memref<1x1x128xf32, #tpu.memory_space<vmem>>, vector<1x1x128xf32>
    tpu.vector_store %arg6[%c0_28, %c0_29, %c0_30], %96 {strides = array<i32>} : memref<1x1x128xf32, #tpu.memory_space<vmem>>, vector<1x1x128xf32>,
    return
  }
  func.func @transform_0(%arg0: i32) -> (i32, i32, i32) {
    %c0_i32 = arith.constant 0 : i32
    %c0_i32_0 = arith.constant 0 : i32
    %c0_i32_1 = arith.constant 0 : i32
    return %arg0, %c0_i32, %c0_i32_0 : i32, i32, i32
  }
  func.func @transform_1(%arg0: i32) -> (i32, i32) {
    %c0_i32 = arith.constant 0 : i32
    %c0_i32_0 = arith.constant 0 : i32
    %c0_i32_1 = arith.constant 0 : i32
    return %c0_i32, %c0_i32_0 : i32, i32
  }
  func.func @transform_2(%arg0: i32) -> (i32, i32) {
    %c0_i32 = arith.constant 0 : i32
    %c0_i32_0 = arith.constant 0 : i32
    %c0_i32_1 = arith.constant 0 : i32
    return %c0_i32, %c0_i32_0 : i32, i32
  }
  func.func @transform_3(%arg0: i32) -> (i32, i32) {
    %c0_i32 = arith.constant 0 : i32
    %c0_i32_0 = arith.constant 0 : i32
    %c0_i32_1 = arith.constant 0 : i32
    return %c0_i32, %c0_i32_0 : i32, i32
  }
  func.func @transform_4(%arg0: i32) -> (i32, i32) {
    %c0_i32 = arith.constant 0 : i32
    %c0_i32_0 = arith.constant 0 : i32
    %c0_i32_1 = arith.constant 0 : i32
    return %c0_i32, %c0_i32_0 : i32, i32
  }
  func.func @transform_5(%arg0: i32) -> (i32, i32, i32) {
    %c0_i32 = arith.constant 0 : i32
    %c0_i32_0 = arith.constant 0 : i32
    %c0_i32_1 = arith.constant 0 : i32
    return %arg0, %c0_i32, %c0_i32_0 : i32, i32, i32
  }
}

</mosaic_0001>

<llo_original>
// kernel: tpu_custom_call.1
$region0: #{tpu_custom_call.1}
  #allocation0 [shape = 'u32[]', space=smem, size = 0x4, offset = 0x4, fixed_abs, tag = 'smem constant byte address 0x4 - core index']
  #allocation1 [shape = 'u32[144,128]{1,0:T(1,128)}', space=vmem, size = 0x12000, scoped, tag = 'internal scratch']
  %s0 = inlined_call_operand.vmem [shape: f32[2,8,32], index: 0, kind: input, shape index: {}]
  %s1 = inlined_call_operand.vmem [shape: f32[32,4], index: 1, kind: input, shape index: {}]
  %s2 = inlined_call_operand.vmem [shape: f32[1,4], index: 2, kind: input, shape index: {}]
  %s3 = inlined_call_operand.hbm [shape: f32[128,128], index: 3, kind: input, shape index: {}]
  %s4 = inlined_call_operand.vmem [shape: f32[1,128], index: 4, kind: input, shape index: {}]
  %s5 = inlined_call_operand.hbm [shape: f32[2,1,128], index: 5, kind: output, shape index: {}]
  %s6 = sld [smem:[#allocation0]]
  $region57: #{tpu_custom_call.1} parent=0
    _
  %s8 = ssub.s32 1, %s6
  %s9 = scalar_select 0, %s8, %s6
  $region1: #{tpu_custom_call.1} parent=0
    #allocation2 [shape = 'u8[65536]{0}', space=vmem, size = 0x10000, scoped, tag = 'input window, operand 3, single buffered']
    #allocation3 [shape = 's32[2]{0}', space=sflag, size = 0x8, scoped, tag = 'scoped memory for tpu_custom_call.1']
    #allocation4 [shape = 's32[2]{0}', space=sflag, size = 0x8, scoped, tag = 'scoped memory for tpu_custom_call.1']
    #allocation5 [shape = 'u8[1024]{0}', space=vmem, size = 0x400, scoped, tag = 'output window, operand 0']
    %10 = vsyncpa [#allocation3], 0
    %11 = vsyncpa [#allocation4], 0
    %s12 = scalar_lea.sflag [#allocation4], 1
    %13 = vsyncpa %s12, 0
    loop: start=0, step=1, limit=4
    $region2: #{tpu_custom_call.1} parent=1 // loop_pre_header
      _
    $region3: #{tpu_custom_call.1} parent=1 // loop_header
      %s15 = sphi 0, %s19
      %p16 = scmp.ge.s32.totalorder %s15, 4
      %s25 = sphi 0, %s27
      %s28 = sphi 0, %s25
      %s29 = sphi 0, %s28
      %s45 = sphi 0, %s29
      %s49 = sphi 0, %s49
      %s51 = sphi 0, %s49
      %s52 = sphi 0, %s51
      %s66 = sphi 0, %s52
      %s70 = sphi 0, %s70
      %s72 = sphi 0, %s70
      %s73 = sphi 0, %s72
      %s87 = sphi 0, %s73
      %s91 = sphi 0, %s91
      %s93 = sphi 0, %s91
      %s94 = sphi 0, %s93
      %s108 = sphi 0, %s94
      %s112 = sphi 0, %s112
      %s114 = sphi 0, %s112
      %s115 = sphi 0, %s114
      %s129 = sphi 0, %s115
      %s135 = sphi 0, %s137
      %s138 = sphi 0, %s135
      %s139 = sphi 0, %s138
      %s155 = sphi 0, %s139
    $region4: #{tpu_custom_call.1} parent=1 // loop_header_branch
      %18 = sbr.rel (%p16) target = $region8
    $region5: #{tpu_custom_call.1} parent=1 // loop_body
      %s20 = ssub.s32 %s15, 1
      %s21 = ssub.s32 %s15, 2
      %s22 = sadd.s32 %s15, 1
      %s23 = ssub.s32 %s15, %s22
      %p24 = scmp.eq.s32.totalorder %s23, 0
      %s26 = sadd.s32 %s25, 1
      %s27 = scalar_select %p24, %s25, %s26
      %p30 = pneg %p24
      %p31 = scmp.eq.s32.totalorder %s15, 1
      %p32 = por %p30, %p31
      %p33 = scmp.ne.s32.totalorder %s25, %s28
      %p34 = scmp.eq.s32.totalorder %s15, 0
      %p35 = por %p33, %p34
      %p36 = scmp.ne.s32.totalorder %s25, %s28
      %p37 = scmp.eq.s32.totalorder %s20, 1
      %p38 = por %p36, %p37
      %p39 = scmp.ne.s32.totalorder %s28, %s29
      %p40 = scmp.eq.s32.totalorder %s20, 0
      %p41 = por %p39, %p40
      %p42 = scmp.ne.s32.totalorder %s28, %s29
      %p43 = scmp.eq.s32.totalorder %s21, 1
      %p44 = por %p42, %p43
      %p46 = scmp.ne.s32.totalorder %s29, %s45
      %p47 = scmp.eq.s32.totalorder %s21, 0
      %p48 = por %p46, %p47
      %s50 = sadd.s32 %s49, 1
      %p53 = scmp.eq.s32.totalorder %s15, 1
      %p54 = scmp.ne.s32.totalorder %s49, %s51
      %p55 = scmp.eq.s32.totalorder %s15, 0
      %p56 = por %p54, %p55
      %p57 = scmp.ne.s32.totalorder %s49, %s51
      %p58 = scmp.eq.s32.totalorder %s20, 1
      %p59 = por %p57, %p58
      %p60 = scmp.ne.s32.totalorder %s51, %s52
      %p61 = scmp.eq.s32.totalorder %s20, 0
      %p62 = por %p60, %p61
      %p63 = scmp.ne.s32.totalorder %s51, %s52
      %p64 = scmp.eq.s32.totalorder %s21, 1
      %p65 = por %p63, %p64
      %p67 = scmp.ne.s32.totalorder %s52, %s66
      %p68 = scmp.eq.s32.totalorder %s21, 0
      %p69 = por %p67, %p68
      %s71 = sadd.s32 %s70, 1
      %p74 = scmp.eq.s32.totalorder %s15, 1
      %p75 = scmp.ne.s32.totalorder %s70, %s72
      %p76 = scmp.eq.s32.totalorder %s15, 0
      %p77 = por %p75, %p76
      %p78 = scmp.ne.s32.totalorder %s70, %s72
      %p79 = scmp.eq.s32.totalorder %s20, 1
      %p80 = por %p78, %p79
      %p81 = scmp.ne.s32.totalorder %s72, %s73
      %p82 = scmp.eq.s32.totalorder %s20, 0
      %p83 = por %p81, %p82
      %p84 = scmp.ne.s32.totalorder %s72, %s73
      %p85 = scmp.eq.s32.totalorder %s21, 1
      %p86 = por %p84, %p85
      %p88 = scmp.ne.s32.totalorder %s73, %s87
      %p89 = scmp.eq.s32.totalorder %s21, 0
      %p90 = por %p88, %p89
      %s92 = sadd.s32 %s91, 1
      %p95 = scmp.eq.s32.totalorder %s15, 1
      %p96 = scmp.ne.s32.totalorder %s91, %s93
      %p97 = scmp.eq.s32.totalorder %s15, 0
      %p98 = por %p96, %p97
      %p99 = scmp.ne.s32.totalorder %s91, %s93
      %p100 = scmp.eq.s32.totalorder %s20, 1
      %p101 = por %p99, %p100
      %p102 = scmp.ne.s32.totalorder %s93, %s94
      %p103 = scmp.eq.s32.totalorder %s20, 0
      %p104 = por %p102, %p103
      %p105 = scmp.ne.s32.totalorder %s93, %s94
      %p106 = scmp.eq.s32.totalorder %s21, 1
      %p107 = por %p105, %p106
      %p109 = scmp.ne.s32.totalorder %s94, %s108
      %p110 = scmp.eq.s32.totalorder %s21, 0
      %p111 = por %p109, %p110
      %s113 = sadd.s32 %s112, 1
      %p116 = scmp.eq.s32.totalorder %s15, 1
      %p117 = scmp.ne.s32.totalorder %s112, %s114
      %p118 = scmp.eq.s32.totalorder %s15, 0
      %p119 = por %p117, %p118
      %p120 = scmp.ne.s32.totalorder %s112, %s114
      %p121 = scmp.eq.s32.totalorder %s20, 1
      %p122 = por %p120, %p121
      %p123 = scmp.ne.s32.totalorder %s114, %s115
      %p124 = scmp.eq.s32.totalorder %s20, 0
      %p125 = por %p123, %p124
      %p126 = scmp.ne.s32.totalorder %s114, %s115
      %p127 = scmp.eq.s32.totalorder %s21, 1
      %p128 = por %p126, %p127
      %p130 = scmp.ne.s32.totalorder %s115, %s129
      %p131 = scmp.eq.s32.totalorder %s21, 0
      %p132 = por %p130, %p131
      %s133 = ssub.s32 %s15, %s22
      %p134 = scmp.eq.s32.totalorder %s133, 0
      %s136 = sadd.s32 %s135, 1
      %s137 = scalar_select %p134, %s135, %s136
      %p140 = pneg %p134
      %p141 = scmp.eq.s32.totalorder %s15, 1
      %p142 = por %p140, %p141
      %p143 = scmp.ne.s32.totalorder %s135, %s138
      %p144 = scmp.eq.s32.totalorder %s15, 0
      %p145 = por %p143, %p144
      %p146 = scmp.ne.s32.totalorder %s135, %s138
      %p147 = scmp.eq.s32.totalorder %s20, 1
      %p148 = por %p146, %p147
      %p149 = scmp.ne.s32.totalorder %s138, %s139
      %p150 = scmp.eq.s32.totalorder %s20, 0
      %p151 = por %p149, %p150
      %p152 = scmp.ne.s32.totalorder %s138, %s139
      %p153 = scmp.eq.s32.totalorder %s21, 1
      %p154 = por %p152, %p153
      %p156 = scmp.ne.s32.totalorder %s139, %s155
      %p157 = scmp.eq.s32.totalorder %s21, 0
      %p158 = por %p156, %p157
      %p159 = scmp.le.s32.totalorder 1, %s15
      %p160 = scmp.lt.s32.totalorder %s15, 3
      %p161 = pnand %p159, %p160
      %p162 = pneg %p161
      // Predicated region
      $region9: #{tpu_custom_call.1} parent=5 // pred_check
        _
      $region10: #{tpu_custom_call.1} parent=5 // pred_check_branch
        %164 = sbr.rel (%p161) target = $region12
      $region11: #{tpu_custom_call.1} parent=5 // pred_region
        %s165 = ssub.s32 %s15, 1
        // Predicated region
        $region13: #{tpu_custom_call.1} parent=11 // pred_check
          %p166 = pneg %p62
        $region14: #{tpu_custom_call.1} parent=11 // pred_check_branch
          %168 = sbr.rel (%p166) target = $region16
        $region15: #{tpu_custom_call.1} parent=11 // pred_region
          _
        $region16: #{tpu_custom_call.1} parent=11 // pred_fallthru
          _
        // Predicated region
        $region17: #{tpu_custom_call.1} parent=11 // pred_check
          %p169 = pneg %p83
        $region18: #{tpu_custom_call.1} parent=11 // pred_check_branch
          %171 = sbr.rel (%p169) target = $region20
        $region19: #{tpu_custom_call.1} parent=11 // pred_region
          _
        $region20: #{tpu_custom_call.1} parent=11 // pred_fallthru
          _
        // Predicated region
        $region21: #{tpu_custom_call.1} parent=11 // pred_check
          %p172 = pneg %p104
        $region22: #{tpu_custom_call.1} parent=11 // pred_check_branch
          %174 = sbr.rel (%p172) target = $region24
        $region23: #{tpu_custom_call.1} parent=11 // pred_region
          %s176 = ssub.s32 2048, 2048
          %177 = vsyncadd [#allocation3], %s176
          %s178 = sshll.u32 [#allocation2], 4
          %s179 = int_to_ptr.vmem [resolvable:$true] %s178
          %184 = dma.hbm_to_vmem [thread:$0]  %s3, 2048, %s179, [#allocation3], 128, 128, 8
        $region24: #{tpu_custom_call.1} parent=11 // pred_fallthru
          _
        // Predicated region
        $region25: #{tpu_custom_call.1} parent=11 // pred_check
          %p185 = pneg %p125
        $region26: #{tpu_custom_call.1} parent=11 // pred_check_branch
          %187 = sbr.rel (%p185) target = $region28
        $region27: #{tpu_custom_call.1} parent=11 // pred_region
          _
        $region28: #{tpu_custom_call.1} parent=11 // pred_fallthru
          _
      $region12: #{tpu_custom_call.1} parent=5 // pred_fallthru
        _
      %p188 = scmp.lt.s32.totalorder %s15, 2
      // Predicated region
      $region29: #{tpu_custom_call.1} parent=5 // pred_check
        %p189 = pneg %p188
      $region30: #{tpu_custom_call.1} parent=5 // pred_check_branch
        %191 = sbr.rel (%p189) target = $region32
      $region31: #{tpu_custom_call.1} parent=5 // pred_region
        // Predicated region
        $region33: #{tpu_custom_call.1} parent=31 // pred_check
          %p192 = pneg %p35
        $region34: #{tpu_custom_call.1} parent=31 // pred_check_branch
          %194 = sbr.rel (%p192) target = $region36
        $region35: #{tpu_custom_call.1} parent=31 // pred_region
          %p195 = scmp.lt.s32.totalorder %s15, 1
          %s196 = scalar_select %p195, %s15, 1
          %s197 = smul.addr %s196, 8
          %s198 = scalar_lea.vmem %s0, %s197
        $region36: #{tpu_custom_call.1} parent=31 // pred_fallthru
          _
      $region32: #{tpu_custom_call.1} parent=5 // pred_fallthru
        _
      %p199 = scmp.le.s32.totalorder 1, %s15
      %p200 = scmp.lt.s32.totalorder %s15, 3
      %p201 = pnand %p199, %p200
      %p202 = pneg %p201
      // Predicated region
      $region37: #{tpu_custom_call.1} parent=5 // pred_check
        _
      $region38: #{tpu_custom_call.1} parent=5 // pred_check_branch
        %204 = sbr.rel (%p201) target = $region40
      $region39: #{tpu_custom_call.1} parent=5 // pred_region
        %s205 = ssub.s32 %s15, 1
        // Predicated region
        $region41: #{tpu_custom_call.1} parent=39 // pred_check
          %p206 = pneg %p104
        $region42: #{tpu_custom_call.1} parent=39 // pred_check_branch
          %208 = sbr.rel (%p206) target = $region44
        $region43: #{tpu_custom_call.1} parent=39 // pred_region
          %209 = dma.done [#allocation3], 2048
        $region44: #{tpu_custom_call.1} parent=39 // pred_fallthru
          _
        %p210 = scmp.lt.s32.totalorder %s20, 1
        %s211 = scalar_select %p210, %s20, 1
        %s212 = smul.addr %s211, 8
        %s213 = scalar_lea.vmem %s0, %s212
        %p214 = pneg %p41
        %p215 = pneg %p38
        %p216 = pneg %p62
        %p217 = pneg %p59
        %p218 = pneg %p83
        %p219 = pneg %p80
        %p220 = pneg %p104
        %p221 = pneg %p101
        %p222 = pneg %p125
        %p223 = pneg %p122
        %p224 = pneg %p151
        %p225 = pneg %p148
        %s226 = sand.u32 %s138, 1
        %s227 = scalar_lea.sflag [#allocation4], %s226
        %s228 = sand.u32 %s138, 1
        %s229 = scalar_lea.vmem [#allocation5], %s228
        %p230 = scmp.lt.s32.totalorder %s20, 1
        %s231 = scalar_select %p230, %s20, 1
        %s232 = smul.addr %s231, 8
        %s233 = scalar_lea.vmem %s0, %s232
        %v234 = vld [vmem:[%s233] sm:$0xff]
        %v235 = vld [vmem:[%s1] sm:$0xff]
        %v236 = vld [vmem:[%s1 + $0x8] sm:$0xff]
        %v237 = vld [vmem:[%s1 + $0x10] sm:$0xff]
        %v238 = vld [vmem:[%s1 + $0x18] sm:$0xff]
        %vm239 = vcmask 261120
        %v241 = vsel %vm239, %v234, 0
        %243 = vmatprep.subr.mxu0 0.0
        %244 = vmatpush1.msra.mxu0 0.0
        %245 = vmatprep.subr.mxu0 0.0
        %246 = vmatpush1.msra.mxu0 0.0
        %247 = vmatprep.subr.mxu0 0.0
        %248 = vmatpush1.msra.mxu0 0.0
        %249 = vmatprep.subr.mxu0 0.0
        %250 = vmatpush1.msra.mxu0 0.0
        %251 = vmatprep.subr.mxu0 0.0
        %252 = vmatpush1.msra.mxu0 0.0
        %253 = vmatprep.subr.mxu0 0.0
        %254 = vmatpush1.msra.mxu0 0.0
        %255 = vmatprep.subr.mxu0 0.0
        %256 = vmatpush1.msra.mxu0 0.0
        %257 = vmatprep.subr.mxu0 0.0
        %258 = vmatpush1.msra.mxu0 0.0
        %259 = vmatprep.subr.mxu0 0.0
        %260 = vmatpush1.msra.mxu0 0.0
        %261 = vmatprep.subr.mxu0 0.0
        %262 = vmatpush1.msra.mxu0 0.0
        %263 = vmatprep.subr.mxu0 0.0
        %264 = vmatpush1.msra.mxu0 0.0
        %265 = vmatprep.subr.mxu0 0.0
        %266 = vmatpush1.msra.mxu0 0.0
        %267 = vmatprep.subr.mxu0 0.0
        %268 = vmatpush1.msra.mxu0 %v238
        %269 = vmatprep.subr.mxu0 0.0
        %270 = vmatpush1.msra.mxu0 %v237
        %271 = vmatprep.subr.mxu0 0.0
        %272 = vmatpush1.msra.mxu0 %v236
        %273 = vmatprep.subr.mxu0 0.0
        %274 = vmatpush1.msra.mxu0 %v235
        %275 = vmatprep.subr.mxu0 0.0
        %276 = vmatpush2.msra.mxu0 0.0
        %277 = vmatprep.subr.mxu0 0.0
        %278 = vmatpush2.msra.mxu0 0.0
        %279 = vmatprep.subr.mxu0 0.0
        %280 = vmatpush2.msra.mxu0 0.0
        %281 = vmatprep.subr.mxu0 0.0
        %282 = vmatpush2.msra.mxu0 0.0
        %283 = vmatprep.subr.mxu0 0.0
        %284 = vmatpush2.msra.mxu0 0.0
        %285 = vmatprep.subr.mxu0 0.0
        %286 = vmatpush2.msra.mxu0 0.0
        %287 = vmatprep.subr.mxu0 0.0
        %288 = vmatpush2.msra.mxu0 0.0
        %289 = vmatprep.subr.mxu0 0.0
        %290 = vmatpush2.msra.mxu0 0.0
        %291 = vmatprep.subr.mxu0 0.0
        %292 = vmatpush2.msra.mxu0 0.0
        %293 = vmatprep.subr.mxu0 0.0
        %294 = vmatpush2.msra.mxu0 0.0
        %295 = vmatprep.subr.mxu0 0.0
        %296 = vmatpush2.msra.mxu0 0.0
        %297 = vmatprep.subr.mxu0 0.0
        %298 = vmatpush2.msra.mxu0 0.0
        %299 = vmatprep.subr.mxu0 0.0
        %300 = vmatpush2.msra.mxu0 0.0
        %301 = vmatprep.subr.mxu0 0.0
        %302 = vmatpush2.msra.mxu0 0.0
        %303 = vmatprep.subr.mxu0 0.0
        %304 = vmatpush2.msra.mxu0 0.0
        %305 = vmatprep.subr.mxu0 0.0
        %306 = vmatpush2.msra.mxu0 0.0
        %307 = vmatprep.mubr.f32.mxu0 0.0
        %308 = vmatmul.mubr.f32.gmra.mxu0 %v241
        %v309 = vpop.f32.mrf.mxu0
        %v310 = vadd.f32 0.0, %v309
        %v311 = vpop.f32.mrf.mxu0
        %312 = vdwg.mxu0
        %v313 = vld [vmem:[%s2] sm:$0x1]
        %v315 = vlaneseq
        %v316 = vshrl.u32 %v315, 7
        %v317 = vsub.s32 0, %v316
        %v318 = vrot.slane %v313, %v317
        %v320 = vadd.f32 %v310, %v318
        %vm321 = vcmask 31744
        %v322 = vsel %vm321, %v320, -inf
        %v323 = vrot.slane %v322, 4
        %v324 = vmax.f32 %v322, %v323
        %v325 = vrot.slane %v324, 2
        %v326 = vmax.f32 %v324, %v325
        %v327 = vrot.slane %v326, 1
        %v328 = vmax.f32 %v326, %v327
        %v329 = vsub.f32 %v320, %v328
        %v330 = vmul.f32 %v329, 1.442695
        %v331 = vpow.pop %v330
        %v332 = vsel %vm321, %v331, 0.0
        %v333 = vrot.slane %v332, 4
        %v334 = vadd.f32 %v332, %v333
        %v335 = vrot.slane %v334, 2
        %v336 = vadd.f32 %v334, %v335
        %v337 = vrot.slane %v336, 1
        %v338 = vadd.f32 %v336, %v337
        %v339 = vrcp.pop %v338
        %v340 = vmul.f32 %v331, %v339
        %v341 = vlaneseq
        %v342 = vshrl.u32 %v341, 7
        %v343 = vsel %vm321, %v340, -inf
        %v344 = vrot.slane %v343, 4
        %v345 = vmax.f32 %v343, %v344
        %v346 = vrot.slane %v345, 2
        %v347 = vmax.f32 %v345, %v346
        %v348 = vrot.slane %v347, 1
        %v349 = vmax.f32 %v347, %v348
        %vm350 = vcmp.eq.f32.partialorder %v340, %v349
        %v351 = vsel %vm350, %v342, 8
        %v352 = vsel %vm321, %v351, 2147483647
        %v353 = vrot.slane %v352, 4
        %vm354 = vcmp.lt.s32.totalorder %v352, %v353
        %v355 = vsel %vm354, %v352, %v353
        %v356 = vrot.slane %v355, 2
        %vm357 = vcmp.lt.s32.totalorder %v355, %v356
        %v358 = vsel %vm357, %v355, %v356
        %v359 = vrot.slane %v358, 1
        %vm360 = vcmp.lt.s32.totalorder %v358, %v359
        %v361 = vsel %vm360, %v358, %v359
        %vm362 = vcmp.eq.s32.totalorder %v342, %v361
        %v363 = vsel %vm362, 1, 0
        %v364 = vcvt.s32.f32 %v363
        %vm365 = vcmp.gt.f32.partialorder %v364, 0.0
        %v366 = vsel %vm365, -inf, %v340
        %v367 = vsel %vm321, %v366, -inf
        %v368 = vrot.slane %v367, 4
        %v369 = vmax.f32 %v367, %v368
        %v370 = vrot.slane %v369, 2
        %v371 = vmax.f32 %v369, %v370
        %v372 = vrot.slane %v371, 1
        %v373 = vmax.f32 %v371, %v372
        %vm374 = vcmp.eq.f32.partialorder %v366, %v373
        %v375 = vsel %vm374, %v342, 8
        %v376 = vsel %vm321, %v375, 2147483647
        %v377 = vrot.slane %v376, 4
        %vm378 = vcmp.lt.s32.totalorder %v376, %v377
        %v379 = vsel %vm378, %v376, %v377
        %v380 = vrot.slane %v379, 2
        %vm381 = vcmp.lt.s32.totalorder %v379, %v380
        %v382 = vsel %vm381, %v379, %v380
        %v383 = vrot.slane %v382, 1
        %vm384 = vcmp.lt.s32.totalorder %v382, %v383
        %v385 = vsel %vm384, %v382, %v383
        %vm386 = vcmp.eq.s32.totalorder %v342, %v385
        %v387 = vsel %vm386, 1, 0
        %v388 = vcvt.s32.f32 %v387
        %vm389 = vcmp.gt.f32.partialorder %v388, 0.0
        %v390 = vsel %vm389, -inf, %v366
        %v391 = vsel %vm321, %v390, -inf
        %v392 = vrot.slane %v391, 4
        %v393 = vmax.f32 %v391, %v392
        %v394 = vrot.slane %v393, 2
        %v395 = vmax.f32 %v393, %v394
        %v396 = vrot.slane %v395, 1
        %v397 = vmax.f32 %v395, %v396
        %vm398 = vcmp.eq.f32.partialorder %v390, %v397
        %v399 = vsel %vm398, %v342, 8
        %v400 = vsel %vm321, %v399, 2147483647
        %v401 = vrot.slane %v400, 4
        %vm402 = vcmp.lt.s32.totalorder %v400, %v401
        %v403 = vsel %vm402, %v400, %v401
        %v404 = vrot.slane %v403, 2
        %vm405 = vcmp.lt.s32.totalorder %v403, %v404
        %v406 = vsel %vm405, %v403, %v404
        %v407 = vrot.slane %v406, 1
        %vm408 = vcmp.lt.s32.totalorder %v406, %v407
        %v409 = vsel %vm408, %v406, %v407
        %vm410 = vcmp.eq.s32.totalorder %v342, %v409
        %v411 = vsel %vm410, 1, 0
        %v412 = vcvt.s32.f32 %v411
        %v413 = vmax.f32 %v349, %v373
        %v414 = vmax.f32 %v413, %v397
        %v415 = vsub.f32 %v349, %v414
        %v416 = vmul.f32 %v415, 1.442695
        %v417 = vpow.pop %v416
        %v418 = vsub.f32 %v373, %v414
        %v419 = vmul.f32 %v418, 1.442695
        %v420 = vpow.pop %v419
        %v421 = vsub.f32 %v397, %v414
        %v422 = vmul.f32 %v421, 1.442695
        %v423 = vpow.pop %v422
        %v424 = vadd.f32 %v417, %v420
        %v425 = vadd.f32 %v424, %v423
        %v426 = vrcp.pop %v425
        %v427 = vmul.f32 %v417, %v426
        %v428 = vmul.f32 %v427, %v364
        %v429 = vadd.f32 %v428, 0.0
        %v430 = vmul.f32 %v420, %v426
        %v431 = vmul.f32 %v430, %v388
        %v432 = vadd.f32 %v429, %v431
        %v433 = vmul.f32 %v423, %v426
        %v434 = vmul.f32 %v433, %v412
        %v435 = vadd.f32 %v432, %v434
        %436 = vxpose.xlu0.b32.start [1/16] %v435, 128
        %437 = vxpose.xlu0.b32.cont [2/16] 0.0, 128
        %438 = vxpose.xlu0.b32.cont [3/16] 0.0, 128
        %439 = vxpose.xlu0.b32.cont [4/16] 0.0, 128
        %440 = vxpose.xlu0.b32.cont [5/16] 0.0, 128
        %441 = vxpose.xlu0.b32.cont [6/16] 0.0, 128
        %442 = vxpose.xlu0.b32.cont [7/16] 0.0, 128
        %443 = vxpose.xlu0.b32.cont [8/16] 0.0, 128
        %444 = vxpose.xlu0.b32.cont [9/16] 0.0, 128
        %445 = vxpose.xlu0.b32.cont [10/16] 0.0, 128
        %446 = vxpose.xlu0.b32.cont [11/16] 0.0, 128
        %447 = vxpose.xlu0.b32.cont [12/16] 0.0, 128
        %448 = vxpose.xlu0.b32.cont [13/16] 0.0, 128
        %449 = vxpose.xlu0.b32.cont [14/16] 0.0, 128
        %450 = vxpose.xlu0.b32.cont [15/16] 0.0, 128
        %451 = vxpose.xlu0.b32.end [16/16] 0.0, 128
        %v452 = vpop.trf.xlu0
        %v453 = vpop.trf.xlu0
        %v454 = vpop.trf.xlu0
        %v455 = vpop.trf.xlu0
        %v456 = vpop.trf.xlu0
        %v457 = vpop.trf.xlu0
        %v458 = vpop.trf.xlu0
        %v459 = vpop.trf.xlu0
        %v460 = vpop.trf.xlu0
        %v461 = vpop.trf.xlu0
        %v462 = vpop.trf.xlu0
        %v463 = vpop.trf.xlu0
        %v464 = vpop.trf.xlu0
        %v465 = vpop.trf.xlu0
        %v466 = vpop.trf.xlu0
        %v467 = vpop.trf.xlu0
        %vm468 = vcmask 64512
        %v470 = vsel %vm468, %v452, 0
        %472 = vmatprep.subr.mxu0 0.0
        %473 = vmatpush1.msra.mxu0 0.0
        %474 = vmatprep.subr.mxu0 0.0
        %475 = vmatpush1.msra.mxu0 0.0
        %476 = vmatprep.subr.mxu0 0.0
        %477 = vmatpush1.msra.mxu0 0.0
        %478 = vmatprep.subr.mxu0 0.0
        %479 = vmatpush1.msra.mxu0 0.0
        %480 = vmatprep.subr.mxu0 0.0
        %481 = vmatpush1.msra.mxu0 0.0
        %482 = vmatprep.subr.mxu0 0.0
        %483 = vmatpush1.msra.mxu0 0.0
        %484 = vmatprep.subr.mxu0 0.0
        %485 = vmatpush1.msra.mxu0 0.0
        %486 = vmatprep.subr.mxu0 0.0
        %487 = vmatpush1.msra.mxu0 0.0
        %488 = vmatprep.subr.mxu0 0.0
        %489 = vmatpush1.msra.mxu0 0.0
        %490 = vmatprep.subr.mxu0 0.0
        %491 = vmatpush1.msra.mxu0 0.0
        %492 = vmatprep.subr.mxu0 0.0
        %493 = vmatpush1.msra.mxu0 0.0
        %494 = vmatprep.subr.mxu0 0.0
        %495 = vmatpush1.msra.mxu0 0.0
        %496 = vmatprep.subr.mxu0 0.0
        %497 = vmatpush1.msra.mxu0 0.0
        %498 = vmatprep.subr.mxu0 0.0
        %499 = vmatpush1.msra.mxu0 0.0
        %500 = vmatprep.subr.mxu0 0.0
        %501 = vmatpush1.msra.mxu0 0.0
        %502 = vmatprep.subr.mxu0 0.0
        %503 = vmatpush1.msra.mxu0 %v234
        %504 = vmatprep.subr.mxu0 0.0
        %505 = vmatpush2.msra.mxu0 0.0
        %506 = vmatprep.subr.mxu0 0.0
        %507 = vmatpush2.msra.mxu0 0.0
        %508 = vmatprep.subr.mxu0 0.0
        %509 = vmatpush2.msra.mxu0 0.0
        %510 = vmatprep.subr.mxu0 0.0
        %511 = vmatpush2.msra.mxu0 0.0
        %512 = vmatprep.subr.mxu0 0.0
        %513 = vmatpush2.msra.mxu0 0.0
        %514 = vmatprep.subr.mxu0 0.0
        %515 = vmatpush2.msra.mxu0 0.0
        %516 = vmatprep.subr.mxu0 0.0
        %517 = vmatpush2.msra.mxu0 0.0
        %518 = vmatprep.subr.mxu0 0.0
        %519 = vmatpush2.msra.mxu0 0.0
        %520 = vmatprep.subr.mxu0 0.0
        %521 = vmatpush2.msra.mxu0 0.0
        %522 = vmatprep.subr.mxu0 0.0
        %523 = vmatpush2.msra.mxu0 0.0
        %524 = vmatprep.subr.mxu0 0.0
        %525 = vmatpush2.msra.mxu0 0.0
        %526 = vmatprep.subr.mxu0 0.0
        %527 = vmatpush2.msra.mxu0 0.0
        %528 = vmatprep.subr.mxu0 0.0
        %529 = vmatpush2.msra.mxu0 0.0
        %530 = vmatprep.subr.mxu0 0.0
        %531 = vmatpush2.msra.mxu0 0.0
        %532 = vmatprep.subr.mxu0 0.0
        %533 = vmatpush2.msra.mxu0 0.0
        %534 = vmatprep.subr.mxu0 0.0
        %535 = vmatpush2.msra.mxu0 0.0
        %536 = vmatprep.mubr.f32.mxu0 0.0
        %537 = vmatmul.mubr.f32.gmra.mxu0 %v470
        %v538 = vpop.f32.mrf.mxu0
        %v539 = vadd.f32 0.0, %v538
        %v540 = vpop.f32.mrf.mxu0
        %541 = vdwg.mxu0
        %v543 = vunpack.c.l.s4 1983009808
        %v544 = vunpack.c.0.s8 %v543
        %v545 = vlaneseq
        %v546 = vshrl.u32 %v545, 7
        %v547 = vsub.s32 %v544, %v546
        %v548 = vrot.slane %v539, %v547
        %v549 = vcombine.high %v548, 0.0
        %v551 = vunpack.c.l.s4 1934713408
        %v552 = vunpack.c.0.s8 %v551
        %v553 = vlaneseq
        %v554 = vshrl.u32 %v553, 7
        %v555 = vsub.s32 %v552, %v554
        %v556 = vrot.slane %v548, %v555
        %v558 = vunpack.c.l.s4 1934713408
        %v559 = vunpack.c.0.s8 %v558
        %v560 = vlaneseq
        %v561 = vshrl.u32 %v560, 7
        %v562 = vsub.s32 %v559, %v561
        %v563 = vrot.slane %v549, %v562
        %v564 = vcombine.high %v556, 0.0
        %v565 = vcombine.high %v563, 0.0
        %567 = vrot.lane.b32.xlu0 %v564, 32
        %v568 = vpop.permute.xlu0 %567
        %571 = vrot.lane.b32.xlu0 %v563, 64
        %v572 = vpop.permute.xlu0 %571
        %575 = vrot.lane.b32.xlu0 %v565, 96
        %v576 = vpop.permute.xlu0 %575
        %v578 = vsel %vm239, %v556, %v568
        %vm579 = vcmask 523264
        %v580 = vsel %vm579, %v578, %v572
        %vm581 = vcmask 785408
        %v582 = vsel %vm581, %v580, %v576
        %v583 = vld [vmem:[#allocation2] sm:$0xff]
        %v584 = vld [vmem:[#allocation2 + $0x8] sm:$0xff]
        %v585 = vld [vmem:[#allocation2 + $0x10] sm:$0xff]
        %v586 = vld [vmem:[#allocation2 + $0x18] sm:$0xff]
        %v587 = vld [vmem:[#allocation2 + $0x20] sm:$0xff]
        %v588 = vld [vmem:[#allocation2 + $0x28] sm:$0xff]
        %v589 = vld [vmem:[#allocation2 + $0x30] sm:$0xff]
        %v590 = vld [vmem:[#allocation2 + $0x38] sm:$0xff]
        %v591 = vld [vmem:[#allocation2 + $0x40] sm:$0xff]
        %v592 = vld [vmem:[#allocation2 + $0x48] sm:$0xff]
        %v593 = vld [vmem:[#allocation2 + $0x50] sm:$0xff]
        %v594 = vld [vmem:[#allocation2 + $0x58] sm:$0xff]
        %v595 = vld [vmem:[#allocation2 + $0x60] sm:$0xff]
        %v596 = vld [vmem:[#allocation2 + $0x68] sm:$0xff]
        %v597 = vld [vmem:[#allocation2 + $0x70] sm:$0xff]
        %v598 = vld [vmem:[#allocation2 + $0x78] sm:$0xff]
        %v599 = vld [vmem:[%s4] sm:$0x1]
        %600 = vmatprep.subr.mxu0 0.0
        %601 = vmatpush1.msra.mxu0 %v598
        %602 = vmatprep.subr.mxu0 0.0
        %603 = vmatpush1.msra.mxu0 %v597
        %604 = vmatprep.subr.mxu0 0.0
        %605 = vmatpush1.msra.mxu0 %v596
        %606 = vmatprep.subr.mxu0 0.0
        %607 = vmatpush1.msra.mxu0 %v595
        %608 = vmatprep.subr.mxu0 0.0
        %609 = vmatpush1.msra.mxu0 %v594
        %610 = vmatprep.subr.mxu0 0.0
        %611 = vmatpush1.msra.mxu0 %v593
        %612 = vmatprep.subr.mxu0 0.0
        %613 = vmatpush1.msra.mxu0 %v592
        %614 = vmatprep.subr.mxu0 0.0
        %615 = vmatpush1.msra.mxu0 %v591
        %616 = vmatprep.subr.mxu0 0.0
        %617 = vmatpush1.msra.mxu0 %v590
        %618 = vmatprep.subr.mxu0 0.0
        %619 = vmatpush1.msra.mxu0 %v589
        %620 = vmatprep.subr.mxu0 0.0
        %621 = vmatpush1.msra.mxu0 %v588
        %622 = vmatprep.subr.mxu0 0.0
        %623 = vmatpush1.msra.mxu0 %v587
        %624 = vmatprep.subr.mxu0 0.0
        %625 = vmatpush1.msra.mxu0 %v586
        %626 = vmatprep.subr.mxu0 0.0
        %627 = vmatpush1.msra.mxu0 %v585
        %628 = vmatprep.subr.mxu0 0.0
        %629 = vmatpush1.msra.mxu0 %v584
        %630 = vmatprep.subr.mxu0 0.0
        %631 = vmatpush1.msra.mxu0 %v583
        %632 = vmatprep.subr.mxu0 0.0
        %633 = vmatpush2.msra.mxu0 0.0
        %634 = vmatprep.subr.mxu0 0.0
        %635 = vmatpush2.msra.mxu0 0.0
        %636 = vmatprep.subr.mxu0 0.0
        %637 = vmatpush2.msra.mxu0 0.0
        %638 = vmatprep.subr.mxu0 0.0
        %639 = vmatpush2.msra.mxu0 0.0
        %640 = vmatprep.subr.mxu0 0.0
        %641 = vmatpush2.msra.mxu0 0.0
        %642 = vmatprep.subr.mxu0 0.0
        %643 = vmatpush2.msra.mxu0 0.0
        %644 = vmatprep.subr.mxu0 0.0
        %645 = vmatpush2.msra.mxu0 0.0
        %646 = vmatprep.subr.mxu0 0.0
        %647 = vmatpush2.msra.mxu0 0.0
        %648 = vmatprep.subr.mxu0 0.0
        %649 = vmatpush2.msra.mxu0 0.0
        %650 = vmatprep.subr.mxu0 0.0
        %651 = vmatpush2.msra.mxu0 0.0
        %652 = vmatprep.subr.mxu0 0.0
        %653 = vmatpush2.msra.mxu0 0.0
        %654 = vmatprep.subr.mxu0 0.0
        %655 = vmatpush2.msra.mxu0 0.0
        %656 = vmatprep.subr.mxu0 0.0
        %657 = vmatpush2.msra.mxu0 0.0
        %658 = vmatprep.subr.mxu0 0.0
        %659 = vmatpush2.msra.mxu0 0.0
        %660 = vmatprep.subr.mxu0 0.0
        %661 = vmatpush2.msra.mxu0 0.0
        %662 = vmatprep.subr.mxu0 0.0
        %663 = vmatpush2.msra.mxu0 0.0
        %664 = vmatprep.mubr.f32.mxu0 0.0
        %665 = vmatmul.mubr.f32.gmra.mxu0 %v582
        %v666 = vpop.f32.mrf.mxu0
        %v667 = vadd.f32 %v599, %v666
        %v668 = vpop.f32.mrf.mxu0
        %669 = vdwg.mxu0
        %v670 = vmul.f32 %v667, 0.25
        %671 = vst [vmem:[%s229] sm:$0x1] %v670
        %s672 = sand.u32 %s138, 1
        %s673 = scalar_lea.sflag [#allocation4], %s672
        %s674 = sand.u32 %s138, 1
        %s675 = scalar_lea.vmem [#allocation5], %s674
        // Predicated region
        $region45: #{tpu_custom_call.1} parent=39 // pred_check
          %p676 = pneg %p148
        $region46: #{tpu_custom_call.1} parent=39 // pred_check_branch
          %678 = sbr.rel (%p676) target = $region48
        $region47: #{tpu_custom_call.1} parent=39 // pred_region
          %s680 = ssub.s32 16, 16
          %681 = vsyncadd %s673, %s680
          %s682 = smul.addr %s20, 16
          %s683 = scalar_lea.hbm %s5, %s682
          %s685 = sshll.u32 %s675, 4
          %s686 = int_to_ptr.vmem [resolvable:$true] %s685
          %688 = dma.vmem_to_hbm [thread:$0]  %s686, 16, %s683, %s673
        $region48: #{tpu_custom_call.1} parent=39 // pred_fallthru
          _
      $region40: #{tpu_custom_call.1} parent=5 // pred_fallthru
        _
      %p689 = scmp.le.s32.totalorder 2, %s15
      // Predicated region
      $region49: #{tpu_custom_call.1} parent=5 // pred_check
        %p690 = pneg %p689
      $region50: #{tpu_custom_call.1} parent=5 // pred_check_branch
        %692 = sbr.rel (%p690) target = $region52
      $region51: #{tpu_custom_call.1} parent=5 // pred_region
        %s693 = ssub.s32 %s15, 2
        // Predicated region
        $region53: #{tpu_custom_call.1} parent=51 // pred_check
          %p694 = pneg %p154
        $region54: #{tpu_custom_call.1} parent=51 // pred_check_branch
          %696 = sbr.rel (%p694) target = $region56
        $region55: #{tpu_custom_call.1} parent=51 // pred_region
          %s697 = sand.u32 %s139, 1
          %s698 = scalar_lea.sflag [#allocation4], %s697
          %s699 = sand.u32 %s139, 1
          %s700 = scalar_lea.vmem [#allocation5], %s699
          %701 = dma.done %s698, 16
        $region56: #{tpu_custom_call.1} parent=51 // pred_fallthru
          _
      $region52: #{tpu_custom_call.1} parent=5 // pred_fallthru
        _
    $region6: #{tpu_custom_call.1} parent=1 // loop_footer
      %s19 = sadd.s32 1, %s15
    $region7: #{tpu_custom_call.1} parent=1 // loop_footer_branch
      %14 = sbr.rel target = $region3
    $region8: #{tpu_custom_call.1} parent=1 // loop_exit
      _
    %702 = vsyncpa [#allocation3], 1
    %s703 = scalar_lea.sflag [#allocation3], 1
    %704 = vsyncpa %s703, 1
    %705 = vsyncpa [#allocation4], 1
    %s706 = scalar_lea.sflag [#allocation4], 1
    %707 = vsyncpa %s706, 1

</llo_original>
